<compile_context>
chip_gen: v6e
topology: v6e:2x2x1
jax: 0.10.0
libtpu: 0.0.40
codegen_flags: <defaults>
</compile_context>

<pallas_src>
import functools

import jax
import jax.numpy as jnp
from jax.experimental import pallas as pl
from jax.experimental.pallas import tpu as pltpu


def class_attn_kernel(x_ref, wq_ref, wkv_ref, wp_ref, bp_ref, hsel_ref,
                      hexp_ref, o_ref, *, scale):
    TB, N, C = x_ref.shape
    H = hsel_ref.shape[1]

    x = x_ref[...]                                           # (TB, N, C) f32
    xs = x.reshape(TB * N, C).astype(jnp.bfloat16)           # (TB*N, C) bf16
    xcls = x[:, 0, :].astype(jnp.bfloat16)                   # (TB, C) class tokens

    # Q projection of the TB class tokens: one (TB, C) @ (C, C) MXU matmul.
    q = jnp.dot(xcls, wq_ref[...],
                preferred_element_type=jnp.float32) * scale  # (TB, C) f32, scaled

    # Fused K/V projection: one (TB*N, C) @ (C, 2C) MXU matmul.
    kv = jnp.dot(xs, wkv_ref[...],
                 preferred_element_type=jnp.float32)         # (TB*N, 2C) f32
    k = kv[:, :C].reshape(TB, N, C)                          # lane-aligned split
    v = kv[:, C:].reshape(TB, N, C)

    # Per-head scores without per-head slicing/transposes:
    #   scores[b, n, h] = sum_{c in head h} q_scaled[b, c] * k[b, n, c]
    qk = q[:, None, :] * k                                   # (TB, N, C)  VPU
    scores = jnp.dot(qk.reshape(TB * N, C), hsel_ref[...],
                     preferred_element_type=jnp.float32).reshape(TB, N, H)

    # Numerically stable softmax over the token axis (f32 math, sublane reduce).
    m = jnp.max(scores, axis=1, keepdims=True)               # (TB, 1, H)
    p = jnp.exp(scores - m)
    denom = jnp.sum(p, axis=1, keepdims=True)
    attn = p * pl.reciprocal(denom, approx=True)             # (TB, N, H)

    # Expand per-head attention back onto the C lanes and contract over tokens:
    #   x_cls[b, c] = sum_n attn[b, n, head(c)] * v[b, n, c]
    attn_c = jnp.dot(attn.reshape(TB * N, H), hexp_ref[...],
                     preferred_element_type=jnp.float32).reshape(TB, N, C)
    x_cls = jnp.sum(attn_c * v, axis=1)                      # (TB, C) f32

    # Output projection with bias (lane-dense (TB, C) store).
    out = jnp.dot(x_cls.astype(jnp.bfloat16), wp_ref[...],
                  preferred_element_type=jnp.float32) + bp_ref[...]
    o_ref[...] = out.astype(o_ref.dtype)


def class_attn(x, wq, wk, wv, wp, bp, *, num_heads, block_b=None):
    """ClassAttn forward. Weights are (C_in, C_out); bp is (C,) or (1, C)."""
    B, N, C = x.shape
    H = num_heads
    head_dim = C // H
    scale = head_dim ** (-0.5)

    # Batch tile: TB batch elements per grid step.  Prefer an 8-aligned batch
    # tile (unmasked sublane stores on the (TB, C) output); otherwise the
    # largest divisor of B that is <= 8.  Larger TB => larger MXU M-dim
    # (TB*N) for the fused K/V projection while staying within VMEM.
    if block_b is None:
        block_b = 8 if B % 8 == 0 else min(8, B)
    TB = max(1, min(block_b, B))
    while B % TB:
        TB -= 1

    # Fuse K/V weights and cast weights to bf16 (MXU-native); bias stays f32.
    wkv = jnp.concatenate([wk, wv], axis=1).astype(jnp.bfloat16)   # (C, 2C)
    wq_bf = wq.astype(jnp.bfloat16)
    wp_bf = wp.astype(jnp.bfloat16)
    bp2 = jnp.reshape(bp, (1, C)).astype(jnp.float32)

    # Head-selector matrices (grid-invariant inputs, exact 0/1 values, f32).
    head_ids = jnp.arange(C, dtype=jnp.int32) // head_dim
    hsel = (head_ids[:, None] == jnp.arange(H, dtype=jnp.int32)[None, :]
            ).astype(jnp.float32)                                  # (C, H)
    hexp = hsel.T                                                  # (H, C)

    # Rough VMEM footprint (double-buffered inputs + intermediate headroom).
    w_vmem = 2 * (C * C + C * 2 * C + C * C) * 2          # bf16 weights, 2 bufs
    x_vmem = 2 * TB * N * C * 4                            # f32 x tile, 2 bufs
    o_vmem = 2 * TB * C * 4
    interm = 8 * TB * N * C * 4                            # kv, qk, attn_c, ...
    vmem_limit = int(min(max(w_vmem + x_vmem + o_vmem + interm + (4 << 20),
                             16 << 20), 48 << 20))

    kernel = functools.partial(class_attn_kernel, scale=scale)

    out2d = pl.pallas_call(
        kernel,
        out_shape=jax.ShapeDtypeStruct((B, C), x.dtype),
        grid=(B // TB,),
        in_specs=[
            pl.BlockSpec((TB, N, C), lambda b: (b, 0, 0)),   # x tile (per step)
            pl.BlockSpec((C, C), lambda b: (0, 0)),          # Wq    (bf16)
            pl.BlockSpec((C, 2 * C), lambda b: (0, 0)),      # Wkv   (bf16, fused)
            pl.BlockSpec((C, C), lambda b: (0, 0)),          # Wproj (bf16)
            pl.BlockSpec((1, C), lambda b: (0, 0)),          # bproj (f32)
            pl.BlockSpec((C, H), lambda b: (0, 0)),          # head selector
            pl.BlockSpec((H, C), lambda b: (0, 0)),          # head expander
        ],
        out_specs=pl.BlockSpec((TB, C), lambda b: (b, 0)),   # lane-dense output
        compiler_params=pltpu.CompilerParams(
            dimension_semantics=("parallel",),
            vmem_limit_bytes=vmem_limit),
    )(x, wq_bf, wkv, wp_bf, bp2, hsel, hexp)

    return out2d[:, None, :]                                 # (B, 1, C)


def class_attn_ref(x, wq, wk, wv, wp, bp, *, num_heads):
    """Pure-JAX f32 reference mirroring the PyTorch forward."""
    B, N, C = x.shape
    hd = C // num_heads
    scale = hd ** (-0.5)
    q = (x[:, 0] @ wq).reshape(B, 1, num_heads, hd).transpose(0, 2, 1, 3)
    k = (x @ wk).reshape(B, N, num_heads, hd).transpose(0, 2, 1, 3)
    v = (x @ wv).reshape(B, N, num_heads, hd).transpose(0, 2, 1, 3)
    attn = jax.nn.softmax((q * scale) @ jnp.swapaxes(k, -2, -1), axis=-1)
    x_cls = (attn @ v).transpose(0, 2, 1, 3).reshape(B, 1, C)
    return x_cls @ wp + jnp.reshape(bp, (1, C))


if __name__ == "__main__":
    # Lane/sublane-aligned small shapes: B=8, N=16, C=128, 4 heads (hd=32).
    B, N, C = 8, 16, 128
    num_heads = 4

    key = jax.random.PRNGKey(0)
    kx, kq, kk, kv, kp, kb = jax.random.split(key, 6)

    x = jax.random.normal(kx, (B, N, C), dtype=jnp.float32)
    # nn.Linear(dim, dim) parameters, stored pre-transposed as (C_in, C_out).
    wq = 0.05 * jax.random.normal(kq, (C, C), dtype=jnp.float32)
    wk = 0.05 * jax.random.normal(kk, (C, C), dtype=jnp.float32)
    wv = 0.05 * jax.random.normal(kv, (C, C), dtype=jnp.float32)
    wp = 0.05 * jax.random.normal(kp, (C, C), dtype=jnp.float32)
    bp = 0.05 * jax.random.normal(kb, (C,), dtype=jnp.float32)

    out = class_attn(x, wq, wk, wv, wp, bp, num_heads=num_heads)
    out = jax.block_until_ready(out)

    ref = class_attn_ref(x, wq, wk, wv, wp, bp, num_heads=num_heads)
    assert out.shape == (B, 1, C)
    # bf16 MXU inputs with f32 accumulation -> compare at bf16-level tolerance.
    assert jnp.allclose(out, ref, rtol=2e-2, atol=2e-2), "mismatch vs reference"

    print("KERNEL_OK")
</pallas_src>

<mosaic_0001>
module attributes {stable_mosaic.version = 11 : i64} {
  func.func @class_attn_kernel(%arg0: i32, %arg1: memref<8x16x128xf32, #tpu.memory_space<vmem>>, %arg2: memref<128x128xbf16, #tpu.memory_space<vmem>>, %arg3: memref<128x256xbf16, #tpu.memory_space<vmem>>, %arg4: memref<128x128xbf16, #tpu.memory_space<vmem>>, %arg5: memref<1x128xf32, #tpu.memory_space<vmem>>, %arg6: memref<128x4xf32, #tpu.memory_space<vmem>>, %arg7: memref<4x128xf32, #tpu.memory_space<vmem>>, %arg8: memref<8x128xf32, #tpu.memory_space<vmem>>) attributes {dimension_semantics = [#tpu.dimension_semantics<parallel>], iteration_bounds = array<i64: 1>, scalar_prefetch = 0 : i64, scratch_operands = 0 : i64, tpu.core_type = #tpu.core_type<tc>, window_params = [{transform_indices = @transform_0, window_bounds = array<i64: 8, 16, 128>}, {pipeline_mode = #tpu.pipeline_mode<synchronous>, transform_indices = @transform_1, window_bounds = array<i64: 128, 128>}, {pipeline_mode = #tpu.pipeline_mode<synchronous>, transform_indices = @transform_2, window_bounds = array<i64: 128, 256>}, {pipeline_mode = #tpu.pipeline_mode<synchronous>, transform_indices = @transform_3, window_bounds = array<i64: 128, 128>}, {pipeline_mode = #tpu.pipeline_mode<synchronous>, transform_indices = @transform_4, window_bounds = array<i64: 1, 128>}, {pipeline_mode = #tpu.pipeline_mode<synchronous>, transform_indices = @transform_5, window_bounds = array<i64: 128, 4>}, {pipeline_mode = #tpu.pipeline_mode<synchronous>, transform_indices = @transform_6, window_bounds = array<i64: 4, 128>}, {transform_indices = @transform_7, window_bounds = array<i64: 8, 128>}]} {
    %c0 = arith.constant 0 : index
    %c0_0 = arith.constant 0 : index
    %c0_1 = arith.constant 0 : index
    %0 = vector.load %arg1[%c0, %c0_0, %c0_1] : memref<8x16x128xf32, #tpu.memory_space<vmem>>, vector<8x16x128xf32>
    %1 = vector.shape_cast %0 : vector<8x16x128xf32> to vector<128x128xf32>
    %2 = arith.truncf %1 : vector<128x128xf32> to vector<128x128xbf16>
    %3 = vector.extract_strided_slice %0 {offsets = [0, 0, 0], sizes = [8, 1, 128], strides = [1, 1, 1]} : vector<8x16x128xf32> to vector<8x1x128xf32>
    %4 = vector.shape_cast %3 : vector<8x1x128xf32> to vector<8x128xf32>
    %5 = arith.truncf %4 : vector<8x128xf32> to vector<8x128xbf16>
    %c0_2 = arith.constant 0 : index
    %c0_3 = arith.constant 0 : index
    %6 = vector.load %arg2[%c0_2, %c0_3] : memref<128x128xbf16, #tpu.memory_space<vmem>>, vector<128x128xbf16>
    %cst = arith.constant dense<0.000000e+00> : vector<8x128xf32>
    %7 = tpu.matmul %5, %6, %cst {dimension_numbers = #tpu.dot_dimension_numbers<[1], [0], [0], [1], [0, 0, 1, 1], [], []>} : vector<8x128xbf16>, vector<128x128xbf16>, vector<8x128xf32> -> vector<8x128xf32>
    %cst_4 = arith.constant 0.176776692 : f32
    %8 = vector.broadcast %cst_4 : f32 to vector<8x128xf32>
    %9 = arith.mulf %7, %8 : vector<8x128xf32>
    %c0_5 = arith.constant 0 : index
    %c0_6 = arith.constant 0 : index
    %10 = vector.load %arg3[%c0_5, %c0_6] : memref<128x256xbf16, #tpu.memory_space<vmem>>, vector<128x256xbf16>
    %cst_7 = arith.constant dense<0.000000e+00> : vector<128x256xf32>
    %11 = tpu.matmul %2, %10, %cst_7 {dimension_numbers = #tpu.dot_dimension_numbers<[1], [0], [0], [1], [0, 0, 1, 1], [], []>} : vector<128x128xbf16>, vector<128x256xbf16>, vector<128x256xf32> -> vector<128x256xf32>
    %12 = vector.extract_strided_slice %11 {offsets = [0, 0], sizes = [128, 128], strides = [1, 1]} : vector<128x256xf32> to vector<128x128xf32>
    %13 = vector.shape_cast %12 : vector<128x128xf32> to vector<8x16x128xf32>
    %14 = vector.extract_strided_slice %11 {offsets = [0, 128], sizes = [128, 128], strides = [1, 1]} : vector<128x256xf32> to vector<128x128xf32>
    %15 = vector.shape_cast %14 : vector<128x128xf32> to vector<8x16x128xf32>
    %16 = vector.shape_cast %9 : vector<8x128xf32> to vector<8x1x128xf32>
    %17 = vector.broadcast %16 : vector<8x1x128xf32> to vector<8x16x128xf32>
    %18 = arith.mulf %17, %13 : vector<8x16x128xf32>
    %19 = vector.shape_cast %18 : vector<8x16x128xf32> to vector<128x128xf32>
    %c0_8 = arith.constant 0 : index
    %c0_9 = arith.constant 0 : index
    %20 = vector.load %arg6[%c0_8, %c0_9] : memref<128x4xf32, #tpu.memory_space<vmem>>, vector<128x4xf32>
    %cst_10 = arith.constant dense<0.000000e+00> : vector<128x4xf32>
    %21 = tpu.matmul %19, %20, %cst_10 {dimension_numbers = #tpu.dot_dimension_numbers<[1], [0], [0], [1], [0, 0, 1, 1], [], []>} : vector<128x128xf32>, vector<128x4xf32>, vector<128x4xf32> -> vector<128x4xf32>
    %22 = vector.shape_cast %21 : vector<128x4xf32> to vector<8x16x4xf32>
    %cst_11 = arith.constant dense<0xFF800000> : vector<8x4xf32>
    %23 = vector.multi_reduction <maximumf>, %22, %cst_11 [1] : vector<8x16x4xf32> to vector<8x4xf32>
    %24 = vector.shape_cast %23 : vector<8x4xf32> to vector<8x1x4xf32>
    %25 = vector.broadcast %24 : vector<8x1x4xf32> to vector<8x16x4xf32>
    %26 = arith.subf %22, %25 : vector<8x16x4xf32>
    %27 = math.exp %26 : vector<8x16x4xf32>
    %cst_12 = arith.constant dense<0.000000e+00> : vector<8x4xf32>
    %28 = vector.multi_reduction <add>, %27, %cst_12 [1] : vector<8x16x4xf32> to vector<8x4xf32>
    %29 = vector.shape_cast %28 : vector<8x4xf32> to vector<8x1x4xf32>
    %30 = tpu.reciprocal %29 {approx = true} : vector<8x1x4xf32> -> vector<8x1x4xf32>
    %31 = vector.broadcast %30 : vector<8x1x4xf32> to vector<8x16x4xf32>
    %32 = arith.mulf %27, %31 : vector<8x16x4xf32>
    %33 = vector.shape_cast %32 : vector<8x16x4xf32> to vector<128x4xf32>
    %c0_13 = arith.constant 0 : index
    %c0_14 = arith.constant 0 : index
    %34 = vector.load %arg7[%c0_13, %c0_14] : memref<4x128xf32, #tpu.memory_space<vmem>>, vector<4x128xf32>
    %cst_15 = arith.constant dense<0.000000e+00> : vector<128x128xf32>
    %35 = tpu.matmul %33, %34, %cst_15 {dimension_numbers = #tpu.dot_dimension_numbers<[1], [0], [0], [1], [0, 0, 1, 1], [], []>} : vector<128x4xf32>, vector<4x128xf32>, vector<128x128xf32> -> vector<128x128xf32>
    %36 = vector.shape_cast %35 : vector<128x128xf32> to vector<8x16x128xf32>
    %37 = arith.mulf %36, %15 : vector<8x16x128xf32>
    %cst_16 = arith.constant dense<0.000000e+00> : vector<8x128xf32>
    %38 = vector.multi_reduction <add>, %37, %cst_16 [1] : vector<8x16x128xf32> to vector<8x128xf32>
    %39 = arith.truncf %38 : vector<8x128xf32> to vector<8x128xbf16>
    %c0_17 = arith.constant 0 : index
    %c0_18 = arith.constant 0 : index
    %40 = vector.load %arg4[%c0_17, %c0_18] : memref<128x128xbf16, #tpu.memory_space<vmem>>, vector<128x128xbf16>
    %cst_19 = arith.constant dense<0.000000e+00> : vector<8x128xf32>
    %41 = tpu.matmul %39, %40, %cst_19 {dimension_numbers = #tpu.dot_dimension_numbers<[1], [0], [0], [1], [0, 0, 1, 1], [], []>} : vector<8x128xbf16>, vector<128x128xbf16>, vector<8x128xf32> -> vector<8x128xf32>
    %c0_20 = arith.constant 0 : index
    %c0_21 = arith.constant 0 : index
    %42 = vector.load %arg5[%c0_20, %c0_21] : memref<1x128xf32, #tpu.memory_space<vmem>>, vector<1x128xf32>
    %43 = vector.broadcast %42 : vector<1x128xf32> to vector<8x128xf32>
    %44 = arith.addf %41, %43 : vector<8x128xf32>
    %c0_22 = arith.constant 0 : index
    %c0_23 = arith.constant 0 : index
    %45 = vector.load %arg8[%c0_22, %c0_23] : memref<8x128xf32, #tpu.memory_space<vmem>>, vector<8x128xf32>
    tpu.vector_store %arg8[%c0_22, %c0_23], %44 {strides = array<i32>} : memref<8x128xf32, #tpu.memory_space<vmem>>, vector<8x128xf32>,
    return
  }
  func.func @transform_0(%arg0: i32) -> (i32, i32, i32) {
    %c0_i32 = arith.constant 0 : i32
    %c0_i32_0 = arith.constant 0 : i32
    %c0_i32_1 = arith.constant 0 : i32
    return %arg0, %c0_i32, %c0_i32_0 : i32, i32, i32
  }
  func.func @transform_1(%arg0: i32) -> (i32, i32) {
    %c0_i32 = arith.constant 0 : i32
    %c0_i32_0 = arith.constant 0 : i32
    %c0_i32_1 = arith.constant 0 : i32
    return %c0_i32, %c0_i32_0 : i32, i32
  }
  func.func @transform_2(%arg0: i32) -> (i32, i32) {
    %c0_i32 = arith.constant 0 : i32
    %c0_i32_0 = arith.constant 0 : i32
    %c0_i32_1 = arith.constant 0 : i32
    return %c0_i32, %c0_i32_0 : i32, i32
  }
  func.func @transform_3(%arg0: i32) -> (i32, i32) {
    %c0_i32 = arith.constant 0 : i32
    %c0_i32_0 = arith.constant 0 : i32
    %c0_i32_1 = arith.constant 0 : i32
    return %c0_i32, %c0_i32_0 : i32, i32
  }
  func.func @transform_4(%arg0: i32) -> (i32, i32) {
    %c0_i32 = arith.constant 0 : i32
    %c0_i32_0 = arith.constant 0 : i32
    %c0_i32_1 = arith.constant 0 : i32
    return %c0_i32, %c0_i32_0 : i32, i32
  }
  func.func @transform_5(%arg0: i32) -> (i32, i32) {
    %c0_i32 = arith.constant 0 : i32
    %c0_i32_0 = arith.constant 0 : i32
    %c0_i32_1 = arith.constant 0 : i32
    return %c0_i32, %c0_i32_0 : i32, i32
  }
  func.func @transform_6(%arg0: i32) -> (i32, i32) {
    %c0_i32 = arith.constant 0 : i32
    %c0_i32_0 = arith.constant 0 : i32
    %c0_i32_1 = arith.constant 0 : i32
    return %c0_i32, %c0_i32_0 : i32, i32
  }
  func.func @transform_7(%arg0: i32) -> (i32, i32) {
    %c0_i32 = arith.constant 0 : i32
    %c0_i32_0 = arith.constant 0 : i32
    return %arg0, %c0_i32 : i32, i32
  }
}

</mosaic_0001>

<llo_original>
// kernel: tpu_custom_call.1
$region0: #{tpu_custom_call.1}
  #allocation0 [shape = 'u32[]', space=smem, size = 0x4, offset = 0x4, fixed_abs, tag = 'smem constant byte address 0x4 - core index']
  #allocation1 [shape = 'u32[144,128]{1,0:T(1,128)}', space=vmem, size = 0x12000, scoped, tag = 'internal scratch']
  %s0 = inlined_call_operand.vmem [shape: f32[8,16,128], index: 0, kind: input, shape index: {}]
  %s1 = inlined_call_operand.hbm [shape: bf16[128,128], index: 1, kind: input, shape index: {}]
  %s2 = inlined_call_operand.hbm [shape: bf16[128,256], index: 2, kind: input, shape index: {}]
  %s3 = inlined_call_operand.hbm [shape: bf16[128,128], index: 3, kind: input, shape index: {}]
  %s4 = inlined_call_operand.vmem [shape: f32[1,128], index: 4, kind: input, shape index: {}]
  %s5 = inlined_call_operand.vmem [shape: f32[128,4], index: 5, kind: input, shape index: {}]
  %s6 = inlined_call_operand.vmem [shape: f32[4,128], index: 6, kind: input, shape index: {}]
  %s7 = inlined_call_operand.hbm [shape: f32[8,128], index: 7, kind: output, shape index: {}]
  %s8 = sld [smem:[#allocation0]]
  $region50: #{tpu_custom_call.1} parent=0
    _
  %s10 = ssub.s32 1, %s8
  %s11 = scalar_select 0, %s10, %s8
  $region1: #{tpu_custom_call.1} parent=0
    #allocation2 [shape = 'u8[32768]{0}', space=vmem, size = 0x8000, scoped, tag = 'input window, operand 1, single buffered']
    #allocation3 [shape = 's32[1]{0}', space=sflag, size = 0x4, scoped, tag = 'scoped memory for tpu_custom_call.1']
    #allocation4 [shape = 's32[1]{0}', space=sflag, size = 0x4, scoped, tag = 'scoped memory for tpu_custom_call.1']
    #allocation5 [shape = 'u8[65536]{0}', space=vmem, size = 0x10000, scoped, tag = 'input window, operand 2, single buffered']
    #allocation6 [shape = 's32[1]{0}', space=sflag, size = 0x4, scoped, tag = 'scoped memory for tpu_custom_call.1']
    #allocation7 [shape = 'u8[32768]{0}', space=vmem, size = 0x8000, scoped, tag = 'input window, operand 3, single buffered']
    #allocation8 [shape = 'u8[4096]{0}', space=vmem, size = 0x1000, scoped, tag = 'output window, operand 0, single buffered']
    %12 = vsyncpa [#allocation3], 0
    %13 = vsyncpa [#allocation6], 0
    %14 = vsyncpa [#allocation4], 0
    // Predicated region
    $region2: #{tpu_custom_call.1} parent=1 // pred_check
      _
    $region3: #{tpu_custom_call.1} parent=1 // pred_check_branch
      %16 = sbr.rel (0) target = $region5
    $region4: #{tpu_custom_call.1} parent=1 // pred_region
      _
    $region5: #{tpu_custom_call.1} parent=1 // pred_fallthru
      _
    // Predicated region
    $region6: #{tpu_custom_call.1} parent=1 // pred_check
      _
    $region7: #{tpu_custom_call.1} parent=1 // pred_check_branch
      %18 = sbr.rel (0) target = $region9
    $region8: #{tpu_custom_call.1} parent=1 // pred_region
      %s20 = ssub.s32 1024, 1024
      %21 = vsyncadd [#allocation3], %s20
      %s22 = sshll.u32 [#allocation2], 4
      %s23 = int_to_ptr.vmem [resolvable:$true] %s22
      %28 = dma.hbm_to_vmem [thread:$0]  %s1, 1024, %s23, [#allocation3], 64, 64, 4
    $region9: #{tpu_custom_call.1} parent=1 // pred_fallthru
      _
    // Predicated region
    $region10: #{tpu_custom_call.1} parent=1 // pred_check
      _
    $region11: #{tpu_custom_call.1} parent=1 // pred_check_branch
      %30 = sbr.rel (0) target = $region13
    $region12: #{tpu_custom_call.1} parent=1 // pred_region
      %s32 = ssub.s32 2048, 2048
      %33 = vsyncadd [#allocation6], %s32
      %s34 = sshll.u32 [#allocation5], 4
      %s35 = int_to_ptr.vmem [resolvable:$true] %s34
      %40 = dma.hbm_to_vmem [thread:$0]  %s2, 2048, %s35, [#allocation6], 128, 128, 8
    $region13: #{tpu_custom_call.1} parent=1 // pred_fallthru
      _
    // Predicated region
    $region14: #{tpu_custom_call.1} parent=1 // pred_check
      _
    $region15: #{tpu_custom_call.1} parent=1 // pred_check_branch
      %42 = sbr.rel (0) target = $region17
    $region16: #{tpu_custom_call.1} parent=1 // pred_region
      %s44 = ssub.s32 1024, 1024
      %45 = vsyncadd [#allocation6], %s44
      %s46 = sshll.u32 [#allocation7], 4
      %s47 = int_to_ptr.vmem [resolvable:$true] %s46
      %52 = dma.hbm_to_vmem [thread:$0]  %s3, 1024, %s47, [#allocation6], 64, 64, 4
    $region17: #{tpu_custom_call.1} parent=1 // pred_fallthru
      _
    // Predicated region
    $region18: #{tpu_custom_call.1} parent=1 // pred_check
      _
    $region19: #{tpu_custom_call.1} parent=1 // pred_check_branch
      %54 = sbr.rel (0) target = $region21
    $region20: #{tpu_custom_call.1} parent=1 // pred_region
      _
    $region21: #{tpu_custom_call.1} parent=1 // pred_fallthru
      _
    // Predicated region
    $region22: #{tpu_custom_call.1} parent=1 // pred_check
      _
    $region23: #{tpu_custom_call.1} parent=1 // pred_check_branch
      %56 = sbr.rel (0) target = $region25
    $region24: #{tpu_custom_call.1} parent=1 // pred_region
      _
    $region25: #{tpu_custom_call.1} parent=1 // pred_fallthru
      _
    // Predicated region
    $region26: #{tpu_custom_call.1} parent=1 // pred_check
      _
    $region27: #{tpu_custom_call.1} parent=1 // pred_check_branch
      %58 = sbr.rel (0) target = $region29
    $region28: #{tpu_custom_call.1} parent=1 // pred_region
      _
    $region29: #{tpu_custom_call.1} parent=1 // pred_fallthru
      _
    // Predicated region
    $region30: #{tpu_custom_call.1} parent=1 // pred_check
      _
    $region31: #{tpu_custom_call.1} parent=1 // pred_check_branch
      %60 = sbr.rel (0) target = $region33
    $region32: #{tpu_custom_call.1} parent=1 // pred_region
      %61 = dma.done [#allocation3], 1024
    $region33: #{tpu_custom_call.1} parent=1 // pred_fallthru
      _
    // Predicated region
    $region34: #{tpu_custom_call.1} parent=1 // pred_check
      _
    $region35: #{tpu_custom_call.1} parent=1 // pred_check_branch
      %63 = sbr.rel (0) target = $region37
    $region36: #{tpu_custom_call.1} parent=1 // pred_region
      %64 = dma.done [#allocation6], 2048
    $region37: #{tpu_custom_call.1} parent=1 // pred_fallthru
      _
    // Predicated region
    $region38: #{tpu_custom_call.1} parent=1 // pred_check
      _
    $region39: #{tpu_custom_call.1} parent=1 // pred_check_branch
      %66 = sbr.rel (0) target = $region41
    $region40: #{tpu_custom_call.1} parent=1 // pred_region
      %67 = dma.done [#allocation6], 1024
    $region41: #{tpu_custom_call.1} parent=1 // pred_fallthru
      _
    %v69 = vld [vmem:[%s0] sm:$0xff]
    %v70 = vld [vmem:[%s0 + $0x8] sm:$0xff]
    %v71 = vld [vmem:[%s0 + $0x10] sm:$0xff]
    %v72 = vld [vmem:[%s0 + $0x18] sm:$0xff]
    %v73 = vld [vmem:[%s0 + $0x20] sm:$0xff]
    %v74 = vld [vmem:[%s0 + $0x28] sm:$0xff]
    %v75 = vld [vmem:[%s0 + $0x30] sm:$0xff]
    %v76 = vld [vmem:[%s0 + $0x38] sm:$0xff]
    %v77 = vld [vmem:[%s0 + $0x40] sm:$0xff]
    %v78 = vld [vmem:[%s0 + $0x48] sm:$0xff]
    %v79 = vld [vmem:[%s0 + $0x50] sm:$0xff]
    %v80 = vld [vmem:[%s0 + $0x58] sm:$0xff]
    %v81 = vld [vmem:[%s0 + $0x60] sm:$0xff]
    %v82 = vld [vmem:[%s0 + $0x68] sm:$0xff]
    %v83 = vld [vmem:[%s0 + $0x70] sm:$0xff]
    %v84 = vld [vmem:[%s0 + $0x78] sm:$0xff]
    %v85 = vpack.c.bf16 %v70, %v69
    %v86 = vpack.c.bf16 %v72, %v71
    %v87 = vpack.c.bf16 %v74, %v73
    %v88 = vpack.c.bf16 %v76, %v75
    %v89 = vpack.c.bf16 %v78, %v77
    %v90 = vpack.c.bf16 %v80, %v79
    %v91 = vpack.c.bf16 %v82, %v81
    %v92 = vpack.c.bf16 %v84, %v83
    %v93 = vpack.c.bf16 %v69, %v69
    %v94 = vpack.c.bf16 %v71, %v71
    %v95 = vpack.c.bf16 %v73, %v73
    %v96 = vpack.c.bf16 %v75, %v75
    %v97 = vpack.c.bf16 %v77, %v77
    %v98 = vpack.c.bf16 %v79, %v79
    %v99 = vpack.c.bf16 %v81, %v81
    %v100 = vpack.c.bf16 %v83, %v83
    %v101 = vld [vmem:[#allocation2] sm:$0xf]
    %v102 = vld [vmem:[#allocation2 + $0x4] sm:$0xf]
    %v103 = vld [vmem:[#allocation2 + $0x8] sm:$0xf]
    %v104 = vld [vmem:[#allocation2 + $0xc] sm:$0xf]
    %v105 = vld [vmem:[#allocation2 + $0x10] sm:$0xf]
    %v106 = vld [vmem:[#allocation2 + $0x14] sm:$0xf]
    %v107 = vld [vmem:[#allocation2 + $0x18] sm:$0xf]
    %v108 = vld [vmem:[#allocation2 + $0x1c] sm:$0xf]
    %v109 = vld [vmem:[#allocation2 + $0x20] sm:$0xf]
    %v110 = vld [vmem:[#allocation2 + $0x24] sm:$0xf]
    %v111 = vld [vmem:[#allocation2 + $0x28] sm:$0xf]
    %v112 = vld [vmem:[#allocation2 + $0x2c] sm:$0xf]
    %v113 = vld [vmem:[#allocation2 + $0x30] sm:$0xf]
    %v114 = vld [vmem:[#allocation2 + $0x34] sm:$0xf]
    %v115 = vld [vmem:[#allocation2 + $0x38] sm:$0xf]
    %v116 = vld [vmem:[#allocation2 + $0x3c] sm:$0xf]
    %v125 = vunpack.c.l.b16 %v93
    %v126 = vunpack.c.l.b16 %v94
    %v127 = vunpack.c.l.b16 %v95
    %v128 = vunpack.c.l.b16 %v96
    %v129 = vunpack.c.l.b16 %v97
    %v130 = vunpack.c.l.b16 %v98
    %v131 = vunpack.c.l.b16 %v99
    %v132 = vunpack.c.l.b16 %v100
    %v133 = vrot.slane %v126, 7
    %vm134 = vcmask 1041409
    %v135 = vsel %vm134, %v133, %v125
    %v136 = vrot.slane %v127, 6
    %vm137 = vcmask 1042434
    %v138 = vsel %vm137, %v136, %v135
    %v139 = vrot.slane %v128, 5
    %vm140 = vcmask 1043459
    %v141 = vsel %vm140, %v139, %v138
    %v142 = vrot.slane %v129, 4
    %vm143 = vcmask 1044484
    %v144 = vsel %vm143, %v142, %v141
    %v145 = vrot.slane %v130, 3
    %vm146 = vcmask 1045509
    %v147 = vsel %vm146, %v145, %v144
    %v148 = vrot.slane %v131, 2
    %vm149 = vcmask 1046534
    %v150 = vsel %vm149, %v148, %v147
    %v151 = vrot.slane %v132, 1
    %vm152 = vcmask 1047559
    %v153 = vsel %vm152, %v151, %v150
    %v154 = vpack.c.b16 %v153, %v153
    %v172 = vunpack.c.l.b16 %v101
    %v173 = vunpack.c.l.b16 %v102
    %v174 = vunpack.c.l.b16 %v103
    %v175 = vunpack.c.l.b16 %v104
    %v176 = vunpack.c.l.b16 %v105
    %v177 = vunpack.c.l.b16 %v106
    %v178 = vunpack.c.l.b16 %v107
    %v179 = vunpack.c.l.b16 %v108
    %v180 = vunpack.c.l.b16 %v109
    %v181 = vunpack.c.l.b16 %v110
    %v182 = vunpack.c.l.b16 %v111
    %v183 = vunpack.c.l.b16 %v112
    %v184 = vunpack.c.l.b16 %v113
    %v185 = vunpack.c.l.b16 %v114
    %v186 = vunpack.c.l.b16 %v115
    %v187 = vunpack.c.l.b16 %v116
    %v188 = vpack.c.b16 %v173, %v172
    %v189 = vpack.c.b16 %v175, %v174
    %v190 = vpack.c.b16 %v177, %v176
    %v191 = vpack.c.b16 %v179, %v178
    %v192 = vpack.c.b16 %v181, %v180
    %v193 = vpack.c.b16 %v183, %v182
    %v194 = vpack.c.b16 %v185, %v184
    %v195 = vpack.c.b16 %v187, %v186
    %204 = vmatprep.subr.bf16.mxu0 0
    %205 = vmatpush1.bf16.msra.mxu0 %v195
    %206 = vmatprep.subr.bf16.mxu0 0
    %207 = vmatpush1.bf16.msra.mxu0 %v194
    %208 = vmatprep.subr.bf16.mxu0 0
    %209 = vmatpush1.bf16.msra.mxu0 %v193
    %210 = vmatprep.subr.bf16.mxu0 0
    %211 = vmatpush1.bf16.msra.mxu0 %v192
    %212 = vmatprep.subr.bf16.mxu0 0
    %213 = vmatpush1.bf16.msra.mxu0 %v191
    %214 = vmatprep.subr.bf16.mxu0 0
    %215 = vmatpush1.bf16.msra.mxu0 %v190
    %216 = vmatprep.subr.bf16.mxu0 0
    %217 = vmatpush1.bf16.msra.mxu0 %v189
    %218 = vmatprep.subr.bf16.mxu0 0
    %219 = vmatpush1.bf16.msra.mxu0 %v188
    %220 = vmatprep.subr.bf16.mxu0 0
    %221 = vmatpush2.bf16.msra.mxu0 0
    %222 = vmatprep.subr.bf16.mxu0 0
    %223 = vmatpush2.bf16.msra.mxu0 0
    %224 = vmatprep.subr.bf16.mxu0 0
    %225 = vmatpush2.bf16.msra.mxu0 0
    %226 = vmatprep.subr.bf16.mxu0 0
    %227 = vmatpush2.bf16.msra.mxu0 0
    %228 = vmatprep.subr.bf16.mxu0 0
    %229 = vmatpush2.bf16.msra.mxu0 0
    %230 = vmatprep.subr.bf16.mxu0 0
    %231 = vmatpush2.bf16.msra.mxu0 0
    %232 = vmatprep.subr.bf16.mxu0 0
    %233 = vmatpush2.bf16.msra.mxu0 0
    %234 = vmatprep.subr.bf16.mxu0 0
    %235 = vmatpush2.bf16.msra.mxu0 0
    %236 = vmatprep.mubr.bf16.mxu0 0
    %237 = vmatmul.mubr.bf16.gmra.mxu0 %v154
    %v238 = vpop.f32.mrf.mxu0
    %v239 = vadd.f32 0.0, %v238
    %v240 = vpop.f32.mrf.mxu0
    %v241 = vpop.f32.mrf.mxu0
    %v242 = vpop.f32.mrf.mxu0
    %243 = vdwg.mxu0
    %v244 = vmul.f32 %v239, 0.17677669
    %v245 = vld [vmem:[#allocation5] sm:$0xff]
    %v246 = vld [vmem:[#allocation5 + $0x8] sm:$0xff]
    %v247 = vld [vmem:[#allocation5 + $0x10] sm:$0xff]
    %v248 = vld [vmem:[#allocation5 + $0x18] sm:$0xff]
    %v249 = vld [vmem:[#allocation5 + $0x20] sm:$0xff]
    %v250 = vld [vmem:[#allocation5 + $0x28] sm:$0xff]
    %v251 = vld [vmem:[#allocation5 + $0x30] sm:$0xff]
    %v252 = vld [vmem:[#allocation5 + $0x38] sm:$0xff]
    %v253 = vld [vmem:[#allocation5 + $0x40] sm:$0xff]
    %v254 = vld [vmem:[#allocation5 + $0x48] sm:$0xff]
    %v255 = vld [vmem:[#allocation5 + $0x50] sm:$0xff]
    %v256 = vld [vmem:[#allocation5 + $0x58] sm:$0xff]
    %v257 = vld [vmem:[#allocation5 + $0x60] sm:$0xff]
    %v258 = vld [vmem:[#allocation5 + $0x68] sm:$0xff]
    %v259 = vld [vmem:[#allocation5 + $0x70] sm:$0xff]
    %v260 = vld [vmem:[#allocation5 + $0x78] sm:$0xff]
    %v277 = vunpack.c.l.b16 %v245
    %v278 = vunpack.c.h.b16 %v245
    %v279 = vunpack.c.l.b16 %v246
    %v280 = vunpack.c.h.b16 %v246
    %v281 = vunpack.c.l.b16 %v247
    %v282 = vunpack.c.h.b16 %v247
    %v283 = vunpack.c.l.b16 %v248
    %v284 = vunpack.c.h.b16 %v248
    %v285 = vunpack.c.l.b16 %v249
    %v286 = vunpack.c.h.b16 %v249
    %v287 = vunpack.c.l.b16 %v250
    %v288 = vunpack.c.h.b16 %v250
    %v289 = vunpack.c.l.b16 %v251
    %v290 = vunpack.c.h.b16 %v251
    %v291 = vunpack.c.l.b16 %v252
    %v292 = vunpack.c.h.b16 %v252
    %v293 = vunpack.c.l.b16 %v253
    %v294 = vunpack.c.h.b16 %v253
    %v295 = vunpack.c.l.b16 %v254
    %v296 = vunpack.c.h.b16 %v254
    %v297 = vunpack.c.l.b16 %v255
    %v298 = vunpack.c.h.b16 %v255
    %v299 = vunpack.c.l.b16 %v256
    %v300 = vunpack.c.h.b16 %v256
    %v301 = vunpack.c.l.b16 %v257
    %v302 = vunpack.c.h.b16 %v257
    %v303 = vunpack.c.l.b16 %v258
    %v304 = vunpack.c.h.b16 %v258
    %v305 = vunpack.c.l.b16 %v259
    %v306 = vunpack.c.h.b16 %v259
    %v307 = vunpack.c.l.b16 %v260
    %v308 = vunpack.c.h.b16 %v260
    %v309 = vpack.c.b16 %v279, %v277
    %v310 = vpack.c.b16 %v280, %v278
    %v311 = vpack.c.b16 %v283, %v281
    %v312 = vpack.c.b16 %v284, %v282
    %v313 = vpack.c.b16 %v287, %v285
    %v314 = vpack.c.b16 %v288, %v286
    %v315 = vpack.c.b16 %v291, %v289
    %v316 = vpack.c.b16 %v292, %v290
    %v317 = vpack.c.b16 %v295, %v293
    %v318 = vpack.c.b16 %v296, %v294
    %v319 = vpack.c.b16 %v299, %v297
    %v320 = vpack.c.b16 %v300, %v298
    %v321 = vpack.c.b16 %v303, %v301
    %v322 = vpack.c.b16 %v304, %v302
    %v323 = vpack.c.b16 %v307, %v305
    %v324 = vpack.c.b16 %v308, %v306
    %341 = vmatprep.subr.bf16.mxu0 %v324
    %342 = vmatpush1.bf16.msra.mxu0 %v323
    %343 = vmatprep.subr.bf16.mxu0 %v322
    %344 = vmatpush1.bf16.msra.mxu0 %v321
    %345 = vmatprep.subr.bf16.mxu0 %v320
    %346 = vmatpush1.bf16.msra.mxu0 %v319
    %347 = vmatprep.subr.bf16.mxu0 %v318
    %348 = vmatpush1.bf16.msra.mxu0 %v317
    %349 = vmatprep.subr.bf16.mxu0 %v316
    %350 = vmatpush1.bf16.msra.mxu0 %v315
    %351 = vmatprep.subr.bf16.mxu0 %v314
    %352 = vmatpush1.bf16.msra.mxu0 %v313
    %353 = vmatprep.subr.bf16.mxu0 %v312
    %354 = vmatpush1.bf16.msra.mxu0 %v311
    %355 = vmatprep.subr.bf16.mxu0 %v310
    %356 = vmatpush1.bf16.msra.mxu0 %v309
    %357 = vmatprep.subr.bf16.mxu0 0
    %358 = vmatpush2.bf16.msra.mxu0 0
    %359 = vmatprep.subr.bf16.mxu0 0
    %360 = vmatpush2.bf16.msra.mxu0 0
    %361 = vmatprep.subr.bf16.mxu0 0
    %362 = vmatpush2.bf16.msra.mxu0 0
    %363 = vmatprep.subr.bf16.mxu0 0
    %364 = vmatpush2.bf16.msra.mxu0 0
    %365 = vmatprep.subr.bf16.mxu0 0
    %366 = vmatpush2.bf16.msra.mxu0 0
    %367 = vmatprep.subr.bf16.mxu0 0
    %368 = vmatpush2.bf16.msra.mxu0 0
    %369 = vmatprep.subr.bf16.mxu0 0
    %370 = vmatpush2.bf16.msra.mxu0 0
    %371 = vmatprep.subr.bf16.mxu0 0
    %372 = vmatpush2.bf16.msra.mxu0 0
    %373 = vmatprep.mubr.bf16.mxu0 0
    %374 = vmatmul.mubr.bf16.gmra.mxu0 %v85
    %v375 = vpop.f32.mrf.mxu0
    %v376 = vadd.f32 0.0, %v375
    %v377 = vpop.f32.mrf.mxu0
    %v378 = vadd.f32 0.0, %v377
    %v379 = vpop.f32.mrf.mxu0
    %v380 = vadd.f32 0.0, %v379
    %v381 = vpop.f32.mrf.mxu0
    %v382 = vadd.f32 0.0, %v381
    %383 = vmatprep.mubr.bf16.mxu0 0
    %384 = vmatmul.mubr.bf16.gmra.mxu0 %v86
    %v385 = vpop.f32.mrf.mxu0
    %v386 = vadd.f32 0.0, %v385
    %v387 = vpop.f32.mrf.mxu0
    %v388 = vadd.f32 0.0, %v387
    %v389 = vpop.f32.mrf.mxu0
    %v390 = vadd.f32 0.0, %v389
    %v391 = vpop.f32.mrf.mxu0
    %v392 = vadd.f32 0.0, %v391
    %393 = vmatprep.mubr.bf16.mxu0 0
    %394 = vmatmul.mubr.bf16.gmra.mxu0 %v87
    %v395 = vpop.f32.mrf.mxu0
    %v396 = vadd.f32 0.0, %v395
    %v397 = vpop.f32.mrf.mxu0
    %v398 = vadd.f32 0.0, %v397
    %v399 = vpop.f32.mrf.mxu0
    %v400 = vadd.f32 0.0, %v399
    %v401 = vpop.f32.mrf.mxu0
    %v402 = vadd.f32 0.0, %v401
    %403 = vmatprep.mubr.bf16.mxu0 0
    %404 = vmatmul.mubr.bf16.gmra.mxu0 %v88
    %v405 = vpop.f32.mrf.mxu0
    %v406 = vadd.f32 0.0, %v405
    %v407 = vpop.f32.mrf.mxu0
    %v408 = vadd.f32 0.0, %v407
    %v409 = vpop.f32.mrf.mxu0
    %v410 = vadd.f32 0.0, %v409
    %v411 = vpop.f32.mrf.mxu0
    %v412 = vadd.f32 0.0, %v411
    %413 = vmatprep.mubr.bf16.mxu0 0
    %414 = vmatmul.mubr.bf16.gmra.mxu0 %v89
    %v415 = vpop.f32.mrf.mxu0
    %v416 = vadd.f32 0.0, %v415
    %v417 = vpop.f32.mrf.mxu0
    %v418 = vadd.f32 0.0, %v417
    %v419 = vpop.f32.mrf.mxu0
    %v420 = vadd.f32 0.0, %v419
    %v421 = vpop.f32.mrf.mxu0
    %v422 = vadd.f32 0.0, %v421
    %423 = vmatprep.mubr.bf16.mxu0 0
    %424 = vmatmul.mubr.bf16.gmra.mxu0 %v90
    %v425 = vpop.f32.mrf.mxu0
    %v426 = vadd.f32 0.0, %v425
    %v427 = vpop.f32.mrf.mxu0
    %v428 = vadd.f32 0.0, %v427
    %v429 = vpop.f32.mrf.mxu0
    %v430 = vadd.f32 0.0, %v429
    %v431 = vpop.f32.mrf.mxu0
    %v432 = vadd.f32 0.0, %v431
    %433 = vmatprep.mubr.bf16.mxu0 0
    %434 = vmatmul.mubr.bf16.gmra.mxu0 %v91
    %v435 = vpop.f32.mrf.mxu0
    %v436 = vadd.f32 0.0, %v435
    %v437 = vpop.f32.mrf.mxu0
    %v438 = vadd.f32 0.0, %v437
    %v439 = vpop.f32.mrf.mxu0
    %v440 = vadd.f32 0.0, %v439
    %v441 = vpop.f32.mrf.mxu0
    %v442 = vadd.f32 0.0, %v441
    %443 = vmatprep.mubr.bf16.mxu0 0
    %444 = vmatmul.mubr.bf16.gmra.mxu0 %v92
    %v445 = vpop.f32.mrf.mxu0
    %v446 = vadd.f32 0.0, %v445
    %v447 = vpop.f32.mrf.mxu0
    %v448 = vadd.f32 0.0, %v447
    %v449 = vpop.f32.mrf.mxu0
    %v450 = vadd.f32 0.0, %v449
    %v451 = vpop.f32.mrf.mxu0
    %v452 = vadd.f32 0.0, %v451
    %453 = vdwg.mxu0
    %v455 = vcombine.high %v244, %v244
    %v457 = vunpack.c.l.s4 1966171168
    %v458 = vunpack.c.0.s8 %v457
    %v459 = vlaneseq
    %v460 = vshrl.u32 %v459, 7
    %v461 = vsub.s32 %v458, %v460
    %v462 = vrot.slane %v244, %v461
    %v464 = vunpack.c.l.s4 1966171168
    %v465 = vunpack.c.0.s8 %v464
    %v466 = vlaneseq
    %v467 = vshrl.u32 %v466, 7
    %v468 = vsub.s32 %v465, %v467
    %v469 = vrot.slane %v455, %v468
    %v470 = vcombine.high %v462, %v462
    %v471 = vcombine.high %v469, %v469
    %v473 = vunpack.c.l.s4 1966171168
    %v474 = vunpack.c.0.s8 %v473
    %v475 = vlaneseq
    %v476 = vshrl.u32 %v475, 7
    %v477 = vsub.s32 %v474, %v476
    %v478 = vrot.slane %v462, %v477
    %v480 = vunpack.c.l.s4 1966171168
    %v481 = vunpack.c.0.s8 %v480
    %v482 = vlaneseq
    %v483 = vshrl.u32 %v482, 7
    %v484 = vsub.s32 %v481, %v483
    %v485 = vrot.slane %v469, %v484
    %v487 = vunpack.c.l.s4 1966171168
    %v488 = vunpack.c.0.s8 %v487
    %v489 = vlaneseq
    %v490 = vshrl.u32 %v489, 7
    %v491 = vsub.s32 %v488, %v490
    %v492 = vrot.slane %v470, %v491
    %v494 = vunpack.c.l.s4 1966171168
    %v495 = vunpack.c.0.s8 %v494
    %v496 = vlaneseq
    %v497 = vshrl.u32 %v496, 7
    %v498 = vsub.s32 %v495, %v497
    %v499 = vrot.slane %v471, %v498
    %v500 = vcombine.high %v478, %v478
    %v501 = vcombine.high %v485, %v485
    %v502 = vcombine.high %v492, %v492
    %v503 = vcombine.high %v499, %v499
    %v504 = vlaneseq
    %v505 = vshrl.u32 %v504, 7
    %v506 = vsub.s32 0, %v505
    %v507 = vrot.slane %v478, %v506
    %v508 = vlaneseq
    %v509 = vshrl.u32 %v508, 7
    %v510 = vsub.s32 0, %v509
    %v511 = vrot.slane %v492, %v510
    %v512 = vlaneseq
    %v513 = vshrl.u32 %v512, 7
    %v514 = vsub.s32 0, %v513
    %v515 = vrot.slane %v500, %v514
    %v516 = vlaneseq
    %v517 = vshrl.u32 %v516, 7
    %v518 = vsub.s32 0, %v517
    %v519 = vrot.slane %v502, %v518
    %v520 = vlaneseq
    %v521 = vshrl.u32 %v520, 7
    %v522 = vsub.s32 0, %v521
    %v523 = vrot.slane %v485, %v522
    %v524 = vlaneseq
    %v525 = vshrl.u32 %v524, 7
    %v526 = vsub.s32 0, %v525
    %v527 = vrot.slane %v499, %v526
    %v528 = vlaneseq
    %v529 = vshrl.u32 %v528, 7
    %v530 = vsub.s32 0, %v529
    %v531 = vrot.slane %v501, %v530
    %v532 = vlaneseq
    %v533 = vshrl.u32 %v532, 7
    %v534 = vsub.s32 0, %v533
    %v535 = vrot.slane %v503, %v534
    %v544 = vmul.f32 %v507, %v376
    %v545 = vmul.f32 %v507, %v380
    %v546 = vmul.f32 %v511, %v386
    %v547 = vmul.f32 %v511, %v390
    %v548 = vmul.f32 %v515, %v396
    %v549 = vmul.f32 %v515, %v400
    %v550 = vmul.f32 %v519, %v406
    %v551 = vmul.f32 %v519, %v410
    %v552 = vmul.f32 %v523, %v416
    %v553 = vmul.f32 %v523, %v420
    %v554 = vmul.f32 %v527, %v426
    %v555 = vmul.f32 %v527, %v430
    %v556 = vmul.f32 %v531, %v436
    %v557 = vmul.f32 %v531, %v440
    %v558 = vmul.f32 %v535, %v446
    %v559 = vmul.f32 %v535, %v450
    %v560 = vld [vmem:[%s5] sm:$0xff]
    %v561 = vld [vmem:[%s5 + $0x8] sm:$0xff]
    %v562 = vld [vmem:[%s5 + $0x10] sm:$0xff]
    %v563 = vld [vmem:[%s5 + $0x18] sm:$0xff]
    %v564 = vld [vmem:[%s5 + $0x20] sm:$0xff]
    %v565 = vld [vmem:[%s5 + $0x28] sm:$0xff]
    %v566 = vld [vmem:[%s5 + $0x30] sm:$0xff]
    %v567 = vld [vmem:[%s5 + $0x38] sm:$0xff]
    %v568 = vld [vmem:[%s5 + $0x40] sm:$0xff]
    %v569 = vld [vmem:[%s5 + $0x48] sm:$0xff]
    %v570 = vld [vmem:[%s5 + $0x50] sm:$0xff]
    %v571 = vld [vmem:[%s5 + $0x58] sm:$0xff]
    %v572 = vld [vmem:[%s5 + $0x60] sm:$0xff]
    %v573 = vld [vmem:[%s5 + $0x68] sm:$0xff]
    %v574 = vld [vmem:[%s5 + $0x70] sm:$0xff]
    %v575 = vld [vmem:[%s5 + $0x78] sm:$0xff]
    %576 = vmatprep.subr.mxu0 0.0
    %577 = vmatpush1.msra.mxu0 %v575
    %578 = vmatprep.subr.mxu0 0.0
    %579 = vmatpush1.msra.mxu0 %v574
    %580 = vmatprep.subr.mxu0 0.0
    %581 = vmatpush1.msra.mxu0 %v573
    %582 = vmatprep.subr.mxu0 0.0
    %583 = vmatpush1.msra.mxu0 %v572
    %584 = vmatprep.subr.mxu0 0.0
    %585 = vmatpush1.msra.mxu0 %v571
    %586 = vmatprep.subr.mxu0 0.0
    %587 = vmatpush1.msra.mxu0 %v570
    %588 = vmatprep.subr.mxu0 0.0
    %589 = vmatpush1.msra.mxu0 %v569
    %590 = vmatprep.subr.mxu0 0.0
    %591 = vmatpush1.msra.mxu0 %v568
    %592 = vmatprep.subr.mxu0 0.0
    %593 = vmatpush1.msra.mxu0 %v567
    %594 = vmatprep.subr.mxu0 0.0
    %595 = vmatpush1.msra.mxu0 %v566
    %596 = vmatprep.subr.mxu0 0.0
    %597 = vmatpush1.msra.mxu0 %v565
    %598 = vmatprep.subr.mxu0 0.0
    %599 = vmatpush1.msra.mxu0 %v564
    %600 = vmatprep.subr.mxu0 0.0
    %601 = vmatpush1.msra.mxu0 %v563
    %602 = vmatprep.subr.mxu0 0.0
    %603 = vmatpush1.msra.mxu0 %v562
    %604 = vmatprep.subr.mxu0 0.0
    %605 = vmatpush1.msra.mxu0 %v561
    %606 = vmatprep.subr.mxu0 0.0
    %607 = vmatpush1.msra.mxu0 %v560
    %608 = vmatprep.subr.mxu0 0.0
    %609 = vmatpush2.msra.mxu0 0.0
    %610 = vmatprep.subr.mxu0 0.0
    %611 = vmatpush2.msra.mxu0 0.0
    %612 = vmatprep.subr.mxu0 0.0
    %613 = vmatpush2.msra.mxu0 0.0
    %614 = vmatprep.subr.mxu0 0.0
    %615 = vmatpush2.msra.mxu0 0.0
    %616 = vmatprep.subr.mxu0 0.0
    %617 = vmatpush2.msra.mxu0 0.0
    %618 = vmatprep.subr.mxu0 0.0
    %619 = vmatpush2.msra.mxu0 0.0
    %620 = vmatprep.subr.mxu0 0.0
    %621 = vmatpush2.msra.mxu0 0.0
    %622 = vmatprep.subr.mxu0 0.0
    %623 = vmatpush2.msra.mxu0 0.0
    %624 = vmatprep.subr.mxu0 0.0
    %625 = vmatpush2.msra.mxu0 0.0
    %626 = vmatprep.subr.mxu0 0.0
    %627 = vmatpush2.msra.mxu0 0.0
    %628 = vmatprep.subr.mxu0 0.0
    %629 = vmatpush2.msra.mxu0 0.0
    %630 = vmatprep.subr.mxu0 0.0
    %631 = vmatpush2.msra.mxu0 0.0
    %632 = vmatprep.subr.mxu0 0.0
    %633 = vmatpush2.msra.mxu0 0.0
    %634 = vmatprep.subr.mxu0 0.0
    %635 = vmatpush2.msra.mxu0 0.0
    %636 = vmatprep.subr.mxu0 0.0
    %637 = vmatpush2.msra.mxu0 0.0
    %638 = vmatprep.subr.mxu0 0.0
    %639 = vmatpush2.msra.mxu0 0.0
    %640 = vmatprep.mubr.f32.mxu0 0.0
    %641 = vmatmul.mubr.f32.gmra.mxu0 %v544
    %v642 = vpop.f32.mrf.mxu0
    %v643 = vadd.f32 0.0, %v642
    %v644 = vpop.f32.mrf.mxu0
    %645 = vmatprep.mubr.f32.mxu0 0.0
    %646 = vmatmul.mubr.f32.gmra.mxu0 %v545
    %v647 = vpop.f32.mrf.mxu0
    %v648 = vadd.f32 0.0, %v647
    %v649 = vpop.f32.mrf.mxu0
    %650 = vmatprep.mubr.f32.mxu0 0.0
    %651 = vmatmul.mubr.f32.gmra.mxu0 %v546
    %v652 = vpop.f32.mrf.mxu0
    %v653 = vadd.f32 0.0, %v652
    %v654 = vpop.f32.mrf.mxu0
    %655 = vmatprep.mubr.f32.mxu0 0.0
    %656 = vmatmul.mubr.f32.gmra.mxu0 %v547
    %v657 = vpop.f32.mrf.mxu0
    %v658 = vadd.f32 0.0, %v657
    %v659 = vpop.f32.mrf.mxu0
    %660 = vmatprep.mubr.f32.mxu0 0.0
    %661 = vmatmul.mubr.f32.gmra.mxu0 %v548
    %v662 = vpop.f32.mrf.mxu0
    %v663 = vadd.f32 0.0, %v662
    %v664 = vpop.f32.mrf.mxu0
    %665 = vmatprep.mubr.f32.mxu0 0.0
    %666 = vmatmul.mubr.f32.gmra.mxu0 %v549
    %v667 = vpop.f32.mrf.mxu0
    %v668 = vadd.f32 0.0, %v667
    %v669 = vpop.f32.mrf.mxu0
    %670 = vmatprep.mubr.f32.mxu0 0.0
    %671 = vmatmul.mubr.f32.gmra.mxu0 %v550
    %v672 = vpop.f32.mrf.mxu0
    %v673 = vadd.f32 0.0, %v672
    %v674 = vpop.f32.mrf.mxu0
    %675 = vmatprep.mubr.f32.mxu0 0.0
    %676 = vmatmul.mubr.f32.gmra.mxu0 %v551
    %v677 = vpop.f32.mrf.mxu0
    %v678 = vadd.f32 0.0, %v677
    %v679 = vpop.f32.mrf.mxu0
    %680 = vmatprep.mubr.f32.mxu0 0.0
    %681 = vmatmul.mubr.f32.gmra.mxu0 %v552
    %v682 = vpop.f32.mrf.mxu0
    %v683 = vadd.f32 0.0, %v682
    %v684 = vpop.f32.mrf.mxu0
    %685 = vmatprep.mubr.f32.mxu0 0.0
    %686 = vmatmul.mubr.f32.gmra.mxu0 %v553
    %v687 = vpop.f32.mrf.mxu0
    %v688 = vadd.f32 0.0, %v687
    %v689 = vpop.f32.mrf.mxu0
    %690 = vmatprep.mubr.f32.mxu0 0.0
    %691 = vmatmul.mubr.f32.gmra.mxu0 %v554
    %v692 = vpop.f32.mrf.mxu0
    %v693 = vadd.f32 0.0, %v692
    %v694 = vpop.f32.mrf.mxu0
    %695 = vmatprep.mubr.f32.mxu0 0.0
    %696 = vmatmul.mubr.f32.gmra.mxu0 %v555
    %v697 = vpop.f32.mrf.mxu0
    %v698 = vadd.f32 0.0, %v697
    %v699 = vpop.f32.mrf.mxu0
    %700 = vmatprep.mubr.f32.mxu0 0.0
    %701 = vmatmul.mubr.f32.gmra.mxu0 %v556
    %v702 = vpop.f32.mrf.mxu0
    %v703 = vadd.f32 0.0, %v702
    %v704 = vpop.f32.mrf.mxu0
    %705 = vmatprep.mubr.f32.mxu0 0.0
    %706 = vmatmul.mubr.f32.gmra.mxu0 %v557
    %v707 = vpop.f32.mrf.mxu0
    %v708 = vadd.f32 0.0, %v707
    %v709 = vpop.f32.mrf.mxu0
    %710 = vmatprep.mubr.f32.mxu0 0.0
    %711 = vmatmul.mubr.f32.gmra.mxu0 %v558
    %v712 = vpop.f32.mrf.mxu0
    %v713 = vadd.f32 0.0, %v712
    %v714 = vpop.f32.mrf.mxu0
    %715 = vmatprep.mubr.f32.mxu0 0.0
    %716 = vmatmul.mubr.f32.gmra.mxu0 %v559
    %v717 = vpop.f32.mrf.mxu0
    %v718 = vadd.f32 0.0, %v717
    %v719 = vpop.f32.mrf.mxu0
    %720 = vdwg.mxu0
    %vm721 = vcmask 31744
    %v722 = vsel %vm721, %v643, -inf
    %v723 = vsel %vm721, %v648, -inf
    %v724 = vmax.f32 %v722, %v723
    %v725 = vrot.slane %v724, 4
    %v726 = vmax.f32 %v724, %v725
    %v727 = vrot.slane %v726, 2
    %v728 = vmax.f32 %v726, %v727
    %v729 = vrot.slane %v728, 1
    %v730 = vmax.f32 %v728, %v729
    %v731 = vsel %vm721, %v653, -inf
    %v732 = vsel %vm721, %v658, -inf
    %v733 = vmax.f32 %v731, %v732
    %v734 = vrot.slane %v733, 4
    %v735 = vmax.f32 %v733, %v734
    %v736 = vrot.slane %v735, 2
    %v737 = vmax.f32 %v735, %v736
    %v738 = vrot.slane %v737, 1
    %v739 = vmax.f32 %v737, %v738
    %v740 = vsel %vm721, %v663, -inf
    %v741 = vsel %vm721, %v668, -inf
    %v742 = vmax.f32 %v740, %v741
    %v743 = vrot.slane %v742, 4
    %v744 = vmax.f32 %v742, %v743
    %v745 = vrot.slane %v744, 2
    %v746 = vmax.f32 %v744, %v745
    %v747 = vrot.slane %v746, 1
    %v748 = vmax.f32 %v746, %v747
    %v749 = vsel %vm721, %v673, -inf
    %v750 = vsel %vm721, %v678, -inf
    %v751 = vmax.f32 %v749, %v750
    %v752 = vrot.slane %v751, 4
    %v753 = vmax.f32 %v751, %v752
    %v754 = vrot.slane %v753, 2
    %v755 = vmax.f32 %v753, %v754
    %v756 = vrot.slane %v755, 1
    %v757 = vmax.f32 %v755, %v756
    %v758 = vsel %vm721, %v683, -inf
    %v759 = vsel %vm721, %v688, -inf
    %v760 = vmax.f32 %v758, %v759
    %v761 = vrot.slane %v760, 4
    %v762 = vmax.f32 %v760, %v761
    %v763 = vrot.slane %v762, 2
    %v764 = vmax.f32 %v762, %v763
    %v765 = vrot.slane %v764, 1
    %v766 = vmax.f32 %v764, %v765
    %v767 = vsel %vm721, %v693, -inf
    %v768 = vsel %vm721, %v698, -inf
    %v769 = vmax.f32 %v767, %v768
    %v770 = vrot.slane %v769, 4
    %v771 = vmax.f32 %v769, %v770
    %v772 = vrot.slane %v771, 2
    %v773 = vmax.f32 %v771, %v772
    %v774 = vrot.slane %v773, 1
    %v775 = vmax.f32 %v773, %v774
    %v776 = vsel %vm721, %v703, -inf
    %v777 = vsel %vm721, %v708, -inf
    %v778 = vmax.f32 %v776, %v777
    %v779 = vrot.slane %v778, 4
    %v780 = vmax.f32 %v778, %v779
    %v781 = vrot.slane %v780, 2
    %v782 = vmax.f32 %v780, %v781
    %v783 = vrot.slane %v782, 1
    %v784 = vmax.f32 %v782, %v783
    %v785 = vsel %vm721, %v713, -inf
    %v786 = vsel %vm721, %v718, -inf
    %v787 = vmax.f32 %v785, %v786
    %v788 = vrot.slane %v787, 4
    %v789 = vmax.f32 %v787, %v788
    %v790 = vrot.slane %v789, 2
    %v791 = vmax.f32 %v789, %v790
    %v792 = vrot.slane %v791, 1
    %v793 = vmax.f32 %v791, %v792
    %v794 = vsub.f32 %v643, %v730
    %v795 = vsub.f32 %v648, %v730
    %v796 = vsub.f32 %v653, %v739
    %v797 = vsub.f32 %v658, %v739
    %v798 = vsub.f32 %v663, %v748
    %v799 = vsub.f32 %v668, %v748
    %v800 = vsub.f32 %v673, %v757
    %v801 = vsub.f32 %v678, %v757
    %v802 = vsub.f32 %v683, %v766
    %v803 = vsub.f32 %v688, %v766
    %v804 = vsub.f32 %v693, %v775
    %v805 = vsub.f32 %v698, %v775
    %v806 = vsub.f32 %v703, %v784
    %v807 = vsub.f32 %v708, %v784
    %v808 = vsub.f32 %v713, %v793
    %v809 = vsub.f32 %v718, %v793
    %v810 = vmul.f32 %v794, 1.442695
    %v811 = vpow.pop %v810
    %v812 = vmul.f32 %v795, 1.442695
    %v813 = vpow.pop %v812
    %v814 = vmul.f32 %v796, 1.442695
    %v815 = vpow.pop %v814
    %v816 = vmul.f32 %v797, 1.442695
    %v817 = vpow.pop %v816
    %v818 = vmul.f32 %v798, 1.442695
    %v819 = vpow.pop %v818
    %v820 = vmul.f32 %v799, 1.442695
    %v821 = vpow.pop %v820
    %v822 = vmul.f32 %v800, 1.442695
    %v823 = vpow.pop %v822
    %v824 = vmul.f32 %v801, 1.442695
    %v825 = vpow.pop %v824
    %v826 = vmul.f32 %v802, 1.442695
    %v827 = vpow.pop %v826
    %v828 = vmul.f32 %v803, 1.442695
    %v829 = vpow.pop %v828
    %v830 = vmul.f32 %v804, 1.442695
    %v831 = vpow.pop %v830
    %v832 = vmul.f32 %v805, 1.442695
    %v833 = vpow.pop %v832
    %v834 = vmul.f32 %v806, 1.442695
    %v835 = vpow.pop %v834
    %v836 = vmul.f32 %v807, 1.442695
    %v837 = vpow.pop %v836
    %v838 = vmul.f32 %v808, 1.442695
    %v839 = vpow.pop %v838
    %v840 = vmul.f32 %v809, 1.442695
    %v841 = vpow.pop %v840
    %v842 = vsel %vm721, %v811, 0.0
    %v843 = vsel %vm721, %v813, 0.0
    %v844 = vadd.f32 %v842, %v843
    %v845 = vrot.slane %v844, 4
    %v846 = vadd.f32 %v844, %v845
    %v847 = vrot.slane %v846, 2
    %v848 = vadd.f32 %v846, %v847
    %v849 = vrot.slane %v848, 1
    %v850 = vadd.f32 %v848, %v849
    %v851 = vsel %vm721, %v815, 0.0
    %v852 = vsel %vm721, %v817, 0.0
    %v853 = vadd.f32 %v851, %v852
    %v854 = vrot.slane %v853, 4
    %v855 = vadd.f32 %v853, %v854
    %v856 = vrot.slane %v855, 2
    %v857 = vadd.f32 %v855, %v856
    %v858 = vrot.slane %v857, 1
    %v859 = vadd.f32 %v857, %v858
    %v860 = vsel %vm721, %v819, 0.0
    %v861 = vsel %vm721, %v821, 0.0
    %v862 = vadd.f32 %v860, %v861
    %v863 = vrot.slane %v862, 4
    %v864 = vadd.f32 %v862, %v863
    %v865 = vrot.slane %v864, 2
    %v866 = vadd.f32 %v864, %v865
    %v867 = vrot.slane %v866, 1
    %v868 = vadd.f32 %v866, %v867
    %v869 = vsel %vm721, %v823, 0.0
    %v870 = vsel %vm721, %v825, 0.0
    %v871 = vadd.f32 %v869, %v870
    %v872 = vrot.slane %v871, 4
    %v873 = vadd.f32 %v871, %v872
    %v874 = vrot.slane %v873, 2
    %v875 = vadd.f32 %v873, %v874
    %v876 = vrot.slane %v875, 1
    %v877 = vadd.f32 %v875, %v876
    %v878 = vsel %vm721, %v827, 0.0
    %v879 = vsel %vm721, %v829, 0.0
    %v880 = vadd.f32 %v878, %v879
    %v881 = vrot.slane %v880, 4
    %v882 = vadd.f32 %v880, %v881
    %v883 = vrot.slane %v882, 2
    %v884 = vadd.f32 %v882, %v883
    %v885 = vrot.slane %v884, 1
    %v886 = vadd.f32 %v884, %v885
    %v887 = vsel %vm721, %v831, 0.0
    %v888 = vsel %vm721, %v833, 0.0
    %v889 = vadd.f32 %v887, %v888
    %v890 = vrot.slane %v889, 4
    %v891 = vadd.f32 %v889, %v890
    %v892 = vrot.slane %v891, 2
    %v893 = vadd.f32 %v891, %v892
    %v894 = vrot.slane %v893, 1
    %v895 = vadd.f32 %v893, %v894
    %v896 = vsel %vm721, %v835, 0.0
    %v897 = vsel %vm721, %v837, 0.0
    %v898 = vadd.f32 %v896, %v897
    %v899 = vrot.slane %v898, 4
    %v900 = vadd.f32 %v898, %v899
    %v901 = vrot.slane %v900, 2
    %v902 = vadd.f32 %v900, %v901
    %v903 = vrot.slane %v902, 1
    %v904 = vadd.f32 %v902, %v903
    %v905 = vsel %vm721, %v839, 0.0
    %v906 = vsel %vm721, %v841, 0.0
    %v907 = vadd.f32 %v905, %v906
    %v908 = vrot.slane %v907, 4
    %v909 = vadd.f32 %v907, %v908
    %v910 = vrot.slane %v909, 2
    %v911 = vadd.f32 %v909, %v910
    %v912 = vrot.slane %v911, 1
    %v913 = vadd.f32 %v911, %v912
    %v914 = vrcp.pop %v850
    %v915 = vrcp.pop %v859
    %v916 = vrcp.pop %v868
    %v917 = vrcp.pop %v877
    %v918 = vrcp.pop %v886
    %v919 = vrcp.pop %v895
    %v920 = vrcp.pop %v904
    %v921 = vrcp.pop %v913
    %v922 = vmul.f32 %v811, %v914
    %v923 = vmul.f32 %v813, %v914
    %v924 = vmul.f32 %v815, %v915
    %v925 = vmul.f32 %v817, %v915
    %v926 = vmul.f32 %v819, %v916
    %v927 = vmul.f32 %v821, %v916
    %v928 = vmul.f32 %v823, %v917
    %v929 = vmul.f32 %v825, %v917
    %v930 = vmul.f32 %v827, %v918
    %v931 = vmul.f32 %v829, %v918
    %v932 = vmul.f32 %v831, %v919
    %v933 = vmul.f32 %v833, %v919
    %v934 = vmul.f32 %v835, %v920
    %v935 = vmul.f32 %v837, %v920
    %v936 = vmul.f32 %v839, %v921
    %v937 = vmul.f32 %v841, %v921
    %v938 = vld [vmem:[%s6] sm:$0xf]
    %v940 = vsel %vm721, %v922, 0
    %v943 = vsel %vm721, %v923, 0
    %v946 = vsel %vm721, %v924, 0
    %v949 = vsel %vm721, %v925, 0
    %v952 = vsel %vm721, %v926, 0
    %v955 = vsel %vm721, %v927, 0
    %v958 = vsel %vm721, %v928, 0
    %v961 = vsel %vm721, %v929, 0
    %v964 = vsel %vm721, %v930, 0
    %v967 = vsel %vm721, %v931, 0
    %v970 = vsel %vm721, %v932, 0
    %v973 = vsel %vm721, %v933, 0
    %v976 = vsel %vm721, %v934, 0
    %v979 = vsel %vm721, %v935, 0
    %v982 = vsel %vm721, %v936, 0
    %v985 = vsel %vm721, %v937, 0
    %vm987 = vcmask 1043456
    %v989 = vsel %vm987, %v938, 0
    %991 = vmatprep.subr.mxu0 0.0
    %992 = vmatpush1.msra.mxu0 0.0
    %993 = vmatprep.subr.mxu0 0.0
    %994 = vmatpush1.msra.mxu0 0.0
    %995 = vmatprep.subr.mxu0 0.0
    %996 = vmatpush1.msra.mxu0 0.0
    %997 = vmatprep.subr.mxu0 0.0
    %998 = vmatpush1.msra.mxu0 0.0
    %999 = vmatprep.subr.mxu0 0.0
    %1000 = vmatpush1.msra.mxu0 0.0
    %1001 = vmatprep.subr.mxu0 0.0
    %1002 = vmatpush1.msra.mxu0 0.0
    %1003 = vmatprep.subr.mxu0 0.0
    %1004 = vmatpush1.msra.mxu0 0.0
    %1005 = vmatprep.subr.mxu0 0.0
    %1006 = vmatpush1.msra.mxu0 0.0
    %1007 = vmatprep.subr.mxu0 0.0
    %1008 = vmatpush1.msra.mxu0 0.0
    %1009 = vmatprep.subr.mxu0 0.0
    %1010 = vmatpush1.msra.mxu0 0.0
    %1011 = vmatprep.subr.mxu0 0.0
    %1012 = vmatpush1.msra.mxu0 0.0
    %1013 = vmatprep.subr.mxu0 0.0
    %1014 = vmatpush1.msra.mxu0 0.0
    %1015 = vmatprep.subr.mxu0 0.0
    %1016 = vmatpush1.msra.mxu0 0.0
    %1017 = vmatprep.subr.mxu0 0.0
    %1018 = vmatpush1.msra.mxu0 0.0
    %1019 = vmatprep.subr.mxu0 0.0
    %1020 = vmatpush1.msra.mxu0 0.0
    %1021 = vmatprep.subr.mxu0 0.0
    %1022 = vmatpush1.msra.mxu0 %v989
    %1023 = vmatprep.subr.mxu0 0.0
    %1024 = vmatpush2.msra.mxu0 0.0
    %1025 = vmatprep.subr.mxu0 0.0
    %1026 = vmatpush2.msra.mxu0 0.0
    %1027 = vmatprep.subr.mxu0 0.0
    %1028 = vmatpush2.msra.mxu0 0.0
    %1029 = vmatprep.subr.mxu0 0.0
    %1030 = vmatpush2.msra.mxu0 0.0
    %1031 = vmatprep.subr.mxu0 0.0
    %1032 = vmatpush2.msra.mxu0 0.0
    %1033 = vmatprep.subr.mxu0 0.0
    %1034 = vmatpush2.msra.mxu0 0.0
    %1035 = vmatprep.subr.mxu0 0.0
    %1036 = vmatpush2.msra.mxu0 0.0
    %1037 = vmatprep.subr.mxu0 0.0
    %1038 = vmatpush2.msra.mxu0 0.0
    %1039 = vmatprep.subr.mxu0 0.0
    %1040 = vmatpush2.msra.mxu0 0.0
    %1041 = vmatprep.subr.mxu0 0.0
    %1042 = vmatpush2.msra.mxu0 0.0
    %1043 = vmatprep.subr.mxu0 0.0
    %1044 = vmatpush2.msra.mxu0 0.0
    %1045 = vmatprep.subr.mxu0 0.0
    %1046 = vmatpush2.msra.mxu0 0.0
    %1047 = vmatprep.subr.mxu0 0.0
    %1048 = vmatpush2.msra.mxu0 0.0
    %1049 = vmatprep.subr.mxu0 0.0
    %1050 = vmatpush2.msra.mxu0 0.0
    %1051 = vmatprep.subr.mxu0 0.0
    %1052 = vmatpush2.msra.mxu0 0.0
    %1053 = vmatprep.subr.mxu0 0.0
    %1054 = vmatpush2.msra.mxu0 0.0
    %1055 = vmatprep.mubr.f32.mxu0 0.0
    %1056 = vmatmul.mubr.f32.gmra.mxu0 %v940
    %v1057 = vpop.f32.mrf.mxu0
    %v1058 = vadd.f32 0.0, %v1057
    %v1059 = vpop.f32.mrf.mxu0
    %1060 = vmatprep.mubr.f32.mxu0 0.0
    %1061 = vmatmul.mubr.f32.gmra.mxu0 %v943
    %v1062 = vpop.f32.mrf.mxu0
    %v1063 = vadd.f32 0.0, %v1062
    %v1064 = vpop.f32.mrf.mxu0
    %1065 = vmatprep.mubr.f32.mxu0 0.0
    %1066 = vmatmul.mubr.f32.gmra.mxu0 %v946
    %v1067 = vpop.f32.mrf.mxu0
    %v1068 = vadd.f32 0.0, %v1067
    %v1069 = vpop.f32.mrf.mxu0
    %1070 = vmatprep.mubr.f32.mxu0 0.0
    %1071 = vmatmul.mubr.f32.gmra.mxu0 %v949
    %v1072 = vpop.f32.mrf.mxu0
    %v1073 = vadd.f32 0.0, %v1072
    %v1074 = vpop.f32.mrf.mxu0
    %1075 = vmatprep.mubr.f32.mxu0 0.0
    %1076 = vmatmul.mubr.f32.gmra.mxu0 %v952
    %v1077 = vpop.f32.mrf.mxu0
    %v1078 = vadd.f32 0.0, %v1077
    %v1079 = vpop.f32.mrf.mxu0
    %1080 = vmatprep.mubr.f32.mxu0 0.0
    %1081 = vmatmul.mubr.f32.gmra.mxu0 %v955
    %v1082 = vpop.f32.mrf.mxu0
    %v1083 = vadd.f32 0.0, %v1082
    %v1084 = vpop.f32.mrf.mxu0
    %1085 = vmatprep.mubr.f32.mxu0 0.0
    %1086 = vmatmul.mubr.f32.gmra.mxu0 %v958
    %v1087 = vpop.f32.mrf.mxu0
    %v1088 = vadd.f32 0.0, %v1087
    %v1089 = vpop.f32.mrf.mxu0
    %1090 = vmatprep.mubr.f32.mxu0 0.0
    %1091 = vmatmul.mubr.f32.gmra.mxu0 %v961
    %v1092 = vpop.f32.mrf.mxu0
    %v1093 = vadd.f32 0.0, %v1092
    %v1094 = vpop.f32.mrf.mxu0
    %1095 = vmatprep.mubr.f32.mxu0 0.0
    %1096 = vmatmul.mubr.f32.gmra.mxu0 %v964
    %v1097 = vpop.f32.mrf.mxu0
    %v1098 = vadd.f32 0.0, %v1097
    %v1099 = vpop.f32.mrf.mxu0
    %1100 = vmatprep.mubr.f32.mxu0 0.0
    %1101 = vmatmul.mubr.f32.gmra.mxu0 %v967
    %v1102 = vpop.f32.mrf.mxu0
    %v1103 = vadd.f32 0.0, %v1102
    %v1104 = vpop.f32.mrf.mxu0
    %1105 = vmatprep.mubr.f32.mxu0 0.0
    %1106 = vmatmul.mubr.f32.gmra.mxu0 %v970
    %v1107 = vpop.f32.mrf.mxu0
    %v1108 = vadd.f32 0.0, %v1107
    %v1109 = vpop.f32.mrf.mxu0
    %1110 = vmatprep.mubr.f32.mxu0 0.0
    %1111 = vmatmul.mubr.f32.gmra.mxu0 %v973
    %v1112 = vpop.f32.mrf.mxu0
    %v1113 = vadd.f32 0.0, %v1112
    %v1114 = vpop.f32.mrf.mxu0
    %1115 = vmatprep.mubr.f32.mxu0 0.0
    %1116 = vmatmul.mubr.f32.gmra.mxu0 %v976
    %v1117 = vpop.f32.mrf.mxu0
    %v1118 = vadd.f32 0.0, %v1117
    %v1119 = vpop.f32.mrf.mxu0
    %1120 = vmatprep.mubr.f32.mxu0 0.0
    %1121 = vmatmul.mubr.f32.gmra.mxu0 %v979
    %v1122 = vpop.f32.mrf.mxu0
    %v1123 = vadd.f32 0.0, %v1122
    %v1124 = vpop.f32.mrf.mxu0
    %1125 = vmatprep.mubr.f32.mxu0 0.0
    %1126 = vmatmul.mubr.f32.gmra.mxu0 %v982
    %v1127 = vpop.f32.mrf.mxu0
    %v1128 = vadd.f32 0.0, %v1127
    %v1129 = vpop.f32.mrf.mxu0
    %1130 = vmatprep.mubr.f32.mxu0 0.0
    %1131 = vmatmul.mubr.f32.gmra.mxu0 %v985
    %v1132 = vpop.f32.mrf.mxu0
    %v1133 = vadd.f32 0.0, %v1132
    %v1134 = vpop.f32.mrf.mxu0
    %1135 = vdwg.mxu0
    %v1136 = vmul.f32 %v1058, %v378
    %v1137 = vmul.f32 %v1063, %v382
    %v1138 = vmul.f32 %v1068, %v388
    %v1139 = vmul.f32 %v1073, %v392
    %v1140 = vmul.f32 %v1078, %v398
    %v1141 = vmul.f32 %v1083, %v402
    %v1142 = vmul.f32 %v1088, %v408
    %v1143 = vmul.f32 %v1093, %v412
    %v1144 = vmul.f32 %v1098, %v418
    %v1145 = vmul.f32 %v1103, %v422
    %v1146 = vmul.f32 %v1108, %v428
    %v1147 = vmul.f32 %v1113, %v432
    %v1148 = vmul.f32 %v1118, %v438
    %v1149 = vmul.f32 %v1123, %v442
    %v1150 = vmul.f32 %v1128, %v448
    %v1151 = vmul.f32 %v1133, %v452
    %v1152 = vadd.f32 %v1136, %v1137
    %v1153 = vrot.slane %v1152, 4
    %v1154 = vadd.f32 %v1152, %v1153
    %v1155 = vrot.slane %v1154, 2
    %v1156 = vadd.f32 %v1154, %v1155
    %v1157 = vrot.slane %v1156, 1
    %v1158 = vadd.f32 %v1156, %v1157
    %v1159 = vadd.f32 %v1138, %v1139
    %v1160 = vrot.slane %v1159, 4
    %v1161 = vadd.f32 %v1159, %v1160
    %v1162 = vrot.slane %v1161, 2
    %v1163 = vadd.f32 %v1161, %v1162
    %v1164 = vrot.slane %v1163, 1
    %v1165 = vadd.f32 %v1163, %v1164
    %v1166 = vadd.f32 %v1140, %v1141
    %v1167 = vrot.slane %v1166, 4
    %v1168 = vadd.f32 %v1166, %v1167
    %v1169 = vrot.slane %v1168, 2
    %v1170 = vadd.f32 %v1168, %v1169
    %v1171 = vrot.slane %v1170, 1
    %v1172 = vadd.f32 %v1170, %v1171
    %v1173 = vadd.f32 %v1142, %v1143
    %v1174 = vrot.slane %v1173, 4
    %v1175 = vadd.f32 %v1173, %v1174
    %v1176 = vrot.slane %v1175, 2
    %v1177 = vadd.f32 %v1175, %v1176
    %v1178 = vrot.slane %v1177, 1
    %v1179 = vadd.f32 %v1177, %v1178
    %v1180 = vadd.f32 %v1144, %v1145
    %v1181 = vrot.slane %v1180, 4
    %v1182 = vadd.f32 %v1180, %v1181
    %v1183 = vrot.slane %v1182, 2
    %v1184 = vadd.f32 %v1182, %v1183
    %v1185 = vrot.slane %v1184, 1
    %v1186 = vadd.f32 %v1184, %v1185
    %v1187 = vadd.f32 %v1146, %v1147
    %v1188 = vrot.slane %v1187, 4
    %v1189 = vadd.f32 %v1187, %v1188
    %v1190 = vrot.slane %v1189, 2
    %v1191 = vadd.f32 %v1189, %v1190
    %v1192 = vrot.slane %v1191, 1
    %v1193 = vadd.f32 %v1191, %v1192
    %v1194 = vadd.f32 %v1148, %v1149
    %v1195 = vrot.slane %v1194, 4
    %v1196 = vadd.f32 %v1194, %v1195
    %v1197 = vrot.slane %v1196, 2
    %v1198 = vadd.f32 %v1196, %v1197
    %v1199 = vrot.slane %v1198, 1
    %v1200 = vadd.f32 %v1198, %v1199
    %v1201 = vadd.f32 %v1150, %v1151
    %v1202 = vrot.slane %v1201, 4
    %v1203 = vadd.f32 %v1201, %v1202
    %v1204 = vrot.slane %v1203, 2
    %v1205 = vadd.f32 %v1203, %v1204
    %v1206 = vrot.slane %v1205, 1
    %v1207 = vadd.f32 %v1205, %v1206
    %v1208 = vpack.c.bf16 %v1158, %v1158
    %v1209 = vpack.c.bf16 %v1165, %v1165
    %v1210 = vpack.c.bf16 %v1172, %v1172
    %v1211 = vpack.c.bf16 %v1179, %v1179
    %v1212 = vpack.c.bf16 %v1186, %v1186
    %v1213 = vpack.c.bf16 %v1193, %v1193
    %v1214 = vpack.c.bf16 %v1200, %v1200
    %v1215 = vpack.c.bf16 %v1207, %v1207
    %v1216 = vld [vmem:[#allocation7] sm:$0xf]
    %v1217 = vld [vmem:[#allocation7 + $0x4] sm:$0xf]
    %v1218 = vld [vmem:[#allocation7 + $0x8] sm:$0xf]
    %v1219 = vld [vmem:[#allocation7 + $0xc] sm:$0xf]
    %v1220 = vld [vmem:[#allocation7 + $0x10] sm:$0xf]
    %v1221 = vld [vmem:[#allocation7 + $0x14] sm:$0xf]
    %v1222 = vld [vmem:[#allocation7 + $0x18] sm:$0xf]
    %v1223 = vld [vmem:[#allocation7 + $0x1c] sm:$0xf]
    %v1224 = vld [vmem:[#allocation7 + $0x20] sm:$0xf]
    %v1225 = vld [vmem:[#allocation7 + $0x24] sm:$0xf]
    %v1226 = vld [vmem:[#allocation7 + $0x28] sm:$0xf]
    %v1227 = vld [vmem:[#allocation7 + $0x2c] sm:$0xf]
    %v1228 = vld [vmem:[#allocation7 + $0x30] sm:$0xf]
    %v1229 = vld [vmem:[#allocation7 + $0x34] sm:$0xf]
    %v1230 = vld [vmem:[#allocation7 + $0x38] sm:$0xf]
    %v1231 = vld [vmem:[#allocation7 + $0x3c] sm:$0xf]
    %v1232 = vld [vmem:[%s4] sm:$0x1]
    %v1234 = vlaneseq
    %v1235 = vshrl.u32 %v1234, 7
    %v1236 = vsub.s32 0, %v1235
    %v1237 = vrot.slane %v1232, %v1236
    %v1247 = vunpack.c.l.b16 %v1208
    %v1248 = vunpack.c.l.b16 %v1209
    %v1249 = vunpack.c.l.b16 %v1210
    %v1250 = vunpack.c.l.b16 %v1211
    %v1251 = vunpack.c.l.b16 %v1212
    %v1252 = vunpack.c.l.b16 %v1213
    %v1253 = vunpack.c.l.b16 %v1214
    %v1254 = vunpack.c.l.b16 %v1215
    %v1255 = vsel %vm134, %v1248, %v1247
    %v1256 = vsel %vm137, %v1249, %v1255
    %v1257 = vsel %vm140, %v1250, %v1256
    %v1258 = vsel %vm143, %v1251, %v1257
    %v1259 = vsel %vm146, %v1252, %v1258
    %v1260 = vsel %vm149, %v1253, %v1259
    %v1261 = vsel %vm152, %v1254, %v1260
    %v1262 = vpack.c.b16 %v1261, %v1261
    %v1280 = vunpack.c.l.b16 %v1216
    %v1281 = vunpack.c.l.b16 %v1217
    %v1282 = vunpack.c.l.b16 %v1218
    %v1283 = vunpack.c.l.b16 %v1219
    %v1284 = vunpack.c.l.b16 %v1220
    %v1285 = vunpack.c.l.b16 %v1221
    %v1286 = vunpack.c.l.b16 %v1222
    %v1287 = vunpack.c.l.b16 %v1223
    %v1288 = vunpack.c.l.b16 %v1224
    %v1289 = vunpack.c.l.b16 %v1225
    %v1290 = vunpack.c.l.b16 %v1226
    %v1291 = vunpack.c.l.b16 %v1227
    %v1292 = vunpack.c.l.b16 %v1228
    %v1293 = vunpack.c.l.b16 %v1229
    %v1294 = vunpack.c.l.b16 %v1230
    %v1295 = vunpack.c.l.b16 %v1231
    %v1296 = vpack.c.b16 %v1281, %v1280
    %v1297 = vpack.c.b16 %v1283, %v1282
    %v1298 = vpack.c.b16 %v1285, %v1284
    %v1299 = vpack.c.b16 %v1287, %v1286
    %v1300 = vpack.c.b16 %v1289, %v1288
    %v1301 = vpack.c.b16 %v1291, %v1290
    %v1302 = vpack.c.b16 %v1293, %v1292
    %v1303 = vpack.c.b16 %v1295, %v1294
    %1312 = vmatprep.subr.bf16.mxu0 0
    %1313 = vmatpush1.bf16.msra.mxu0 %v1303
    %1314 = vmatprep.subr.bf16.mxu0 0
    %1315 = vmatpush1.bf16.msra.mxu0 %v1302
    %1316 = vmatprep.subr.bf16.mxu0 0
    %1317 = vmatpush1.bf16.msra.mxu0 %v1301
    %1318 = vmatprep.subr.bf16.mxu0 0
    %1319 = vmatpush1.bf16.msra.mxu0 %v1300
    %1320 = vmatprep.subr.bf16.mxu0 0
    %1321 = vmatpush1.bf16.msra.mxu0 %v1299
    %1322 = vmatprep.subr.bf16.mxu0 0
    %1323 = vmatpush1.bf16.msra.mxu0 %v1298
    %1324 = vmatprep.subr.bf16.mxu0 0
    %1325 = vmatpush1.bf16.msra.mxu0 %v1297
    %1326 = vmatprep.subr.bf16.mxu0 0
    %1327 = vmatpush1.bf16.msra.mxu0 %v1296
    %1328 = vmatprep.subr.bf16.mxu0 0
    %1329 = vmatpush2.bf16.msra.mxu0 0
    %1330 = vmatprep.subr.bf16.mxu0 0
    %1331 = vmatpush2.bf16.msra.mxu0 0
    %1332 = vmatprep.subr.bf16.mxu0 0
    %1333 = vmatpush2.bf16.msra.mxu0 0
    %1334 = vmatprep.subr.bf16.mxu0 0
    %1335 = vmatpush2.bf16.msra.mxu0 0
    %1336 = vmatprep.subr.bf16.mxu0 0
    %1337 = vmatpush2.bf16.msra.mxu0 0
    %1338 = vmatprep.subr.bf16.mxu0 0
    %1339 = vmatpush2.bf16.msra.mxu0 0
    %1340 = vmatprep.subr.bf16.mxu0 0
    %1341 = vmatpush2.bf16.msra.mxu0 0
    %1342 = vmatprep.subr.bf16.mxu0 0
    %1343 = vmatpush2.bf16.msra.mxu0 0
    %1344 = vmatprep.mubr.bf16.mxu0 0
    %1345 = vmatmul.mubr.bf16.gmra.mxu0 %v1262
    %v1346 = vpop.f32.mrf.mxu0
    %v1347 = vadd.f32 %v1237, %v1346
    %v1348 = vpop.f32.mrf.mxu0
    %v1349 = vpop.f32.mrf.mxu0
    %v1350 = vpop.f32.mrf.mxu0
    %1351 = vdwg.mxu0
    %1352 = vst [vmem:[#allocation8] sm:$0xff] %v1347
    // Predicated region
    $region42: #{tpu_custom_call.1} parent=1 // pred_check
      _
    $region43: #{tpu_custom_call.1} parent=1 // pred_check_branch
      %1354 = sbr.rel (0) target = $region45
    $region44: #{tpu_custom_call.1} parent=1 // pred_region
      %s1356 = ssub.s32 128, 128
      %1357 = vsyncadd [#allocation4], %s1356
      %s1359 = sshll.u32 [#allocation8], 4
      %s1360 = int_to_ptr.vmem [resolvable:$true] %s1359
      %1362 = dma.vmem_to_hbm [thread:$0]  %s1360, 128, %s7, [#allocation4]
    $region45: #{tpu_custom_call.1} parent=1 // pred_fallthru
      _
    // Predicated region
    $region46: #{tpu_custom_call.1} parent=1 // pred_check
      _
    $region47: #{tpu_custom_call.1} parent=1 // pred_check_branch
      %1364 = sbr.rel (0) target = $region49
    $region48: #{tpu_custom_call.1} parent=1 // pred_region
      %1365 = dma.done [#allocation4], 128
    $region49: #{tpu_custom_call.1} parent=1 // pred_fallthru
      _
    %1366 = vsyncpa [#allocation3], 1
    %1367 = vsyncpa [#allocation6], 1
    %1368 = vsyncpa [#allocation4], 1

</llo_original>
